<compile_context>
chip_gen: v7x
topology: tpu7x:2x2x1
jax: 0.10.0
libtpu: 0.0.40
codegen_flags: <defaults>
</compile_context>

<pallas_src>
import jax
import jax.numpy as jnp
from jax.experimental import pallas as pl
from jax.experimental.pallas import tpu as pltpu  # noqa: F401  (TPU lowering)

BN_EPS = 1e-5
LEAKY_SLOPE = 0.01
NUM_CLASSES = 3
C_PAD = 128       # lane-dense padded class dimension (keep at lane width)
NEG_PAD = -1e30   # padded-logit bias: exp underflows to 0, never wins the max
VEC_ROWS = 8      # sublane-aligned packed-vector operand (gamma/beta/b2 rows)


def label_classifier_kernel(x_ref, w1_ref, w2_ref, vecs_ref, o_ref):
    # ---- Linear 1: (B, D) @ (D, H) -> (B, H) ----
    # b1 intentionally omitted: with batch-statistic BatchNorm the per-feature
    # bias is exactly cancelled by the mean subtraction below.
    h = jnp.dot(x_ref[...], w1_ref[...], preferred_element_type=jnp.float32)
    H = h.shape[1]

    # Packed small vectors: row 0 = gamma, row 1 = beta (first H lanes),
    # row 2 = lane-padded b2 (pad lanes hold -1e30).  Single (8,128) tile DMA.
    vecs = vecs_ref[...]
    gamma = vecs[0:1, :H]      # (1, H)
    beta = vecs[1:2, :H]       # (1, H)
    b2 = vecs[2:3, :]          # (1, C_PAD)

    # ---- BatchNorm1d (training-mode batch statistics, biased variance) ----
    mean = jnp.mean(h, axis=0, keepdims=True)                    # (1, H)
    centered = h - mean
    var = jnp.mean(centered * centered, axis=0, keepdims=True)   # (1, H)
    # Fold gamma into the rsqrt scale: single (B, H) multiply-add.
    scale = gamma * jax.lax.rsqrt(var + BN_EPS)                  # (1, H)
    hn = centered * scale + beta

    # ---- LeakyReLU: mul+max (2 VALU ops), identical for slope in (0,1) ----
    a = jnp.maximum(hn, LEAKY_SLOPE * hn)

    # ---- Dropout: identity (inference semantics) ----
    # TODO(synk): training-mode Dropout (scaled Bernoulli mask via pltpu.prng_*)
    # is intentionally not applied so the kernel stays deterministic.

    # ---- Linear 2 (lane-dense): (B, H) @ (H, 128) + (1, 128) -> (B, 128) ----
    # Padded weight columns are zero and padded bias entries are -1e30, so the
    # padded logits contribute nothing to the max / exp-sum below.
    logits = jnp.dot(a, w2_ref[...], preferred_element_type=jnp.float32) + b2

    # ---- LogSoftmax over the class axis (numerically stable) ----
    m = jnp.max(logits, axis=1, keepdims=True)
    s = logits - m
    lse = jnp.log(jnp.sum(jnp.exp(s), axis=1, keepdims=True))
    o_ref[...] = (s - lse).astype(o_ref.dtype)


def pack_params(w1, b1, gamma, beta, w2, b2):
    """One-time parameter packing (call once when params are created).

    Returns (w1, w2_padded, vecs) ready for label_classifier.
    b1 is accepted for API faithfulness but dropped: it is exactly cancelled by
    the batch-mean subtraction of training-mode BatchNorm1d.
    """
    del b1  # mathematically cancelled by batch-stat BatchNorm
    H, C = w2.shape
    assert C <= C_PAD and H <= C_PAD

    w2_p = jnp.pad(w2.astype(jnp.float32), ((0, 0), (0, C_PAD - C)))

    gb = jnp.stack([gamma.reshape(-1), beta.reshape(-1)]).astype(jnp.float32)
    gb = jnp.pad(gb, ((0, 0), (0, C_PAD - H)))                          # (2, 128)
    b2_row = jnp.pad(b2.reshape(1, -1).astype(jnp.float32),
                     ((0, 0), (0, C_PAD - C)), constant_values=NEG_PAD)  # (1, 128)
    pad_rows = jnp.zeros((VEC_ROWS - 3, C_PAD), jnp.float32)
    vecs = jnp.concatenate([gb, b2_row, pad_rows], axis=0)               # (8, 128)
    return w1.astype(jnp.float32), w2_p, vecs


def label_classifier(x, w1, w2_p, vecs):
    B, D = x.shape
    H = w1.shape[1]

    full = lambda shape: pl.BlockSpec(shape, lambda: (0,) * len(shape))

    bytes_in = sum(int(a.size) * a.dtype.itemsize for a in (x, w1, w2_p, vecs))
    bytes_out = B * C_PAD * 4
    cost = pl.CostEstimate(
        flops=2 * B * D * H + 2 * B * H * C_PAD,
        transcendentals=B * C_PAD + H,   # exp in log-softmax, rsqrt in BN
        bytes_accessed=bytes_in + bytes_out,
    )

    out_padded = pl.pallas_call(
        label_classifier_kernel,
        out_shape=jax.ShapeDtypeStruct((B, C_PAD), jnp.float32),
        grid=(),
        in_specs=[
            full((B, D)),            # x
            full((D, H)),            # W1
            full((H, C_PAD)),        # W2 (lane-padded)
            full((VEC_ROWS, C_PAD)), # packed gamma/beta/b2
        ],
        out_specs=full((B, C_PAD)),
        cost_estimate=cost,
    )(x, w1, w2_p, vecs)

    return out_padded[:, :NUM_CLASSES]


def _reference(x, w1, b1, gamma, beta, w2, b2):
    # Pure-JAX reference (includes b1, which BN batch stats cancel).
    h = x @ w1 + b1
    mean = jnp.mean(h, axis=0, keepdims=True)
    var = jnp.mean((h - mean) ** 2, axis=0, keepdims=True)
    hn = (h - mean) / jnp.sqrt(var + BN_EPS) * gamma + beta
    a = jnp.where(hn >= 0.0, hn, LEAKY_SLOPE * hn)
    logits = a @ w2 + b2
    return jax.nn.log_softmax(logits, axis=1)


if __name__ == "__main__":
    # Small shapes consistent with the module: batch=8, input_dim=32.
    B, D = 8, 32
    H = D // 2          # 16
    C = NUM_CLASSES     # 3
    dropout_p = 0.5     # unused at inference

    key = jax.random.PRNGKey(0)
    kx, kw1, kb1, kw2, kb2 = jax.random.split(key, 5)

    x = jax.random.normal(kx, (B, D), dtype=jnp.float32)

    # Deterministic parameter init (roughly PyTorch-scale uniform).
    lim1 = 1.0 / jnp.sqrt(D)
    w1 = jax.random.uniform(kw1, (D, H), minval=-lim1, maxval=lim1, dtype=jnp.float32)
    b1 = jax.random.uniform(kb1, (1, H), minval=-lim1, maxval=lim1, dtype=jnp.float32)
    gamma = jnp.ones((1, H), dtype=jnp.float32)   # BatchNorm1d default init
    beta = jnp.zeros((1, H), dtype=jnp.float32)
    lim2 = 1.0 / jnp.sqrt(H)
    w2 = jax.random.uniform(kw2, (H, C), minval=-lim2, maxval=lim2, dtype=jnp.float32)
    b2 = jax.random.uniform(kb2, (1, C), minval=-lim2, maxval=lim2, dtype=jnp.float32)

    # One-time packing (padding/stacking hoisted off the per-call path), then
    # jit the forward with packed params closed over as constants.
    w1_k, w2_p, vecs = pack_params(w1, b1, gamma, beta, w2, b2)
    forward = jax.jit(lambda xin: label_classifier(xin, w1_k, w2_p, vecs))

    out = forward(x)
    out = jax.block_until_ready(out)

    ref = _reference(x, w1, b1, gamma, beta, w2, b2)
    assert out.shape == (B, C), out.shape
    assert jnp.allclose(out, ref, atol=1e-4, rtol=1e-4), (out, ref)
    # log-softmax rows should exponentiate-sum to ~1
    assert jnp.allclose(jnp.sum(jnp.exp(out), axis=1), 1.0, atol=1e-4)

    print("KERNEL_OK")
</pallas_src>

<mosaic_0001>
module attributes {stable_mosaic.version = 11 : i64} {
  func.func @label_classifier_kernel(%arg0: memref<8x32xf32, #tpu.memory_space<vmem>>, %arg1: memref<32x16xf32, #tpu.memory_space<vmem>>, %arg2: memref<16x128xf32, #tpu.memory_space<vmem>>, %arg3: memref<8x128xf32, #tpu.memory_space<vmem>>, %arg4: memref<8x128xf32, #tpu.memory_space<vmem>>) attributes {dimension_semantics = [], scalar_prefetch = 0 : i64, scratch_operands = 0 : i64, tpu.core_type = #tpu.core_type<tc>} {
    %c0 = arith.constant 0 : index
    %c0_0 = arith.constant 0 : index
    %0 = vector.load %arg0[%c0, %c0_0] : memref<8x32xf32, #tpu.memory_space<vmem>>, vector<8x32xf32>
    %c0_1 = arith.constant 0 : index
    %c0_2 = arith.constant 0 : index
    %1 = vector.load %arg1[%c0_1, %c0_2] : memref<32x16xf32, #tpu.memory_space<vmem>>, vector<32x16xf32>
    %cst = arith.constant dense<0.000000e+00> : vector<8x16xf32>
    %2 = tpu.matmul %0, %1, %cst {dimension_numbers = #tpu.dot_dimension_numbers<[1], [0], [0], [1], [0, 0, 1, 1], [], []>} : vector<8x32xf32>, vector<32x16xf32>, vector<8x16xf32> -> vector<8x16xf32>
    %c0_3 = arith.constant 0 : index
    %c0_4 = arith.constant 0 : index
    %3 = vector.load %arg3[%c0_3, %c0_4] : memref<8x128xf32, #tpu.memory_space<vmem>>, vector<8x128xf32>
    %4 = vector.extract_strided_slice %3 {offsets = [0, 0], sizes = [1, 16], strides = [1, 1]} : vector<8x128xf32> to vector<1x16xf32>
    %5 = vector.extract_strided_slice %3 {offsets = [1, 0], sizes = [1, 16], strides = [1, 1]} : vector<8x128xf32> to vector<1x16xf32>
    %6 = vector.extract_strided_slice %3 {offsets = [2, 0], sizes = [1, 128], strides = [1, 1]} : vector<8x128xf32> to vector<1x128xf32>
    %cst_5 = arith.constant dense<0.000000e+00> : vector<16xf32>
    %7 = vector.multi_reduction <add>, %2, %cst_5 [0] : vector<8x16xf32> to vector<16xf32>
    %8 = vector.shape_cast %7 : vector<16xf32> to vector<1x16xf32>
    %cst_6 = arith.constant 8.000000e+00 : f32
    %9 = vector.broadcast %cst_6 : f32 to vector<1x16xf32>
    %10 = arith.divf %8, %9 : vector<1x16xf32>
    %11 = vector.broadcast %10 : vector<1x16xf32> to vector<8x16xf32>
    %12 = arith.subf %2, %11 : vector<8x16xf32>
    %13 = arith.mulf %12, %12 : vector<8x16xf32>
    %cst_7 = arith.constant dense<0.000000e+00> : vector<16xf32>
    %14 = vector.multi_reduction <add>, %13, %cst_7 [0] : vector<8x16xf32> to vector<16xf32>
    %15 = vector.shape_cast %14 : vector<16xf32> to vector<1x16xf32>
    %cst_8 = arith.constant 8.000000e+00 : f32
    %16 = vector.broadcast %cst_8 : f32 to vector<1x16xf32>
    %17 = arith.divf %15, %16 : vector<1x16xf32>
    %cst_9 = arith.constant 9.99999974E-6 : f32
    %18 = vector.broadcast %cst_9 : f32 to vector<1x16xf32>
    %19 = arith.addf %17, %18 : vector<1x16xf32>
    %20 = math.rsqrt %19 : vector<1x16xf32>
    %21 = arith.mulf %4, %20 : vector<1x16xf32>
    %22 = vector.broadcast %21 : vector<1x16xf32> to vector<8x16xf32>
    %23 = arith.mulf %12, %22 : vector<8x16xf32>
    %24 = vector.broadcast %5 : vector<1x16xf32> to vector<8x16xf32>
    %25 = arith.addf %23, %24 : vector<8x16xf32>
    %cst_10 = arith.constant 0.00999999977 : f32
    %26 = vector.broadcast %cst_10 : f32 to vector<8x16xf32>
    %27 = arith.mulf %26, %25 : vector<8x16xf32>
    %28 = arith.maximumf %25, %27 : vector<8x16xf32>
    %c0_11 = arith.constant 0 : index
    %c0_12 = arith.constant 0 : index
    %29 = vector.load %arg2[%c0_11, %c0_12] : memref<16x128xf32, #tpu.memory_space<vmem>>, vector<16x128xf32>
    %cst_13 = arith.constant dense<0.000000e+00> : vector<8x128xf32>
    %30 = tpu.matmul %28, %29, %cst_13 {dimension_numbers = #tpu.dot_dimension_numbers<[1], [0], [0], [1], [0, 0, 1, 1], [], []>} : vector<8x16xf32>, vector<16x128xf32>, vector<8x128xf32> -> vector<8x128xf32>
    %31 = vector.broadcast %6 : vector<1x128xf32> to vector<8x128xf32>
    %32 = arith.addf %30, %31 : vector<8x128xf32>
    %cst_14 = arith.constant dense<0xFF800000> : vector<8xf32>
    %33 = vector.multi_reduction <maximumf>, %32, %cst_14 [1] : vector<8x128xf32> to vector<8xf32>
    %34 = vector.shape_cast %33 : vector<8xf32> to vector<8x1xf32>
    %35 = vector.broadcast %34 : vector<8x1xf32> to vector<8x128xf32>
    %36 = arith.subf %32, %35 : vector<8x128xf32>
    %37 = math.exp %36 : vector<8x128xf32>
    %cst_15 = arith.constant dense<0.000000e+00> : vector<8xf32>
    %38 = vector.multi_reduction <add>, %37, %cst_15 [1] : vector<8x128xf32> to vector<8xf32>
    %39 = vector.shape_cast %38 : vector<8xf32> to vector<8x1xf32>
    %40 = math.log %39 : vector<8x1xf32>
    %41 = vector.broadcast %40 : vector<8x1xf32> to vector<8x128xf32>
    %42 = arith.subf %36, %41 : vector<8x128xf32>
    %c0_16 = arith.constant 0 : index
    %c0_17 = arith.constant 0 : index
    %43 = vector.load %arg4[%c0_16, %c0_17] : memref<8x128xf32, #tpu.memory_space<vmem>>, vector<8x128xf32>
    tpu.vector_store %arg4[%c0_16, %c0_17], %42 {strides = array<i32>} : memref<8x128xf32, #tpu.memory_space<vmem>>, vector<8x128xf32>,
    return
  }
}

</mosaic_0001>

<llo_original>
// kernel: _lambda_.1
$region0: #{_lambda_.1}
  #allocation0 [shape = 'u32[]', space=smem, size = 0x4, offset = 0x4, fixed_abs, tag = 'smem constant byte address 0x4 - core index']
  #allocation1 [shape = 'u32[144,128]{1,0:T(1,128)}', space=vmem, size = 0x12000, scoped, tag = 'internal scratch']
  %s0 = inlined_call_operand.hbm [shape: f32[8,32], index: 0, kind: input, shape index: {}]
  %s1 = inlined_call_operand.hbm [shape: f32[32,16], index: 1, kind: input, shape index: {}]
  %s2 = inlined_call_operand.hbm [shape: f32[16,128], index: 2, kind: input, shape index: {}]
  %s3 = inlined_call_operand.vmem [shape: f32[8,128], index: 3, kind: input, shape index: {}]
  %s4 = inlined_call_operand.vmem [shape: f32[8,128], index: 4, kind: output, shape index: {}]
  %s5 = sld [smem:[#allocation0]]
  $region38: #{_lambda_.1} parent=0
    _
  %s7 = ssub.s32 1, %s5
  %s8 = scalar_select 0, %s7, %s5
  $region1: #{_lambda_.1} parent=0
    #allocation2 [shape = 'u8[4096]{0}', space=vmem, size = 0x1000, scoped, tag = 'input window, operand 0, single buffered']
    #allocation3 [shape = 's32[1]{0}', space=sflag, size = 0x4, scoped, tag = 'scoped memory for _lambda_.1']
    #allocation4 [shape = 'u8[16384]{0}', space=vmem, size = 0x4000, scoped, tag = 'input window, operand 1, single buffered']
    #allocation5 [shape = 's32[1]{0}', space=sflag, size = 0x4, scoped, tag = 'scoped memory for _lambda_.1']
    #allocation6 [shape = 'u8[8192]{0}', space=vmem, size = 0x2000, scoped, tag = 'input window, operand 2, single buffered']
    %9 = vsyncpa [#allocation3], 0
    %10 = vsyncpa [#allocation5], 0
    // Predicated region
    $region2: #{_lambda_.1} parent=1 // pred_check
      _
    $region3: #{_lambda_.1} parent=1 // pred_check_branch
      %12 = sbr.rel (0) target = $region5
    $region4: #{_lambda_.1} parent=1 // pred_region
      %s14 = ssub.s32 128, 128
      %15 = vsyncadd [#allocation3], %s14
      %s17 = sshll.u32 [#allocation2], 4
      %s18 = int_to_ptr.vmem [resolvable:$true] %s17
      %20 = dma.hbm_to_vmem [thread:$0]  %s0, 128, %s18, [#allocation3]
    $region5: #{_lambda_.1} parent=1 // pred_fallthru
      _
    // Predicated region
    $region6: #{_lambda_.1} parent=1 // pred_check
      _
    $region7: #{_lambda_.1} parent=1 // pred_check_branch
      %22 = sbr.rel (0) target = $region9
    $region8: #{_lambda_.1} parent=1 // pred_region
      %s24 = ssub.s32 512, 512
      %25 = vsyncadd [#allocation5], %s24
      %s26 = sshll.u32 [#allocation4], 4
      %s27 = int_to_ptr.vmem [resolvable:$true] %s26
      %32 = dma.hbm_to_vmem [thread:$0]  %s1, 512, %s27, [#allocation5], 128, 128, 8
    $region9: #{_lambda_.1} parent=1 // pred_fallthru
      _
    // Predicated region
    $region10: #{_lambda_.1} parent=1 // pred_check
      _
    $region11: #{_lambda_.1} parent=1 // pred_check_branch
      %34 = sbr.rel (0) target = $region13
    $region12: #{_lambda_.1} parent=1 // pred_region
      %s36 = ssub.s32 256, 256
      %37 = vsyncadd [#allocation5], %s36
      %s38 = sshll.u32 [#allocation6], 4
      %s39 = int_to_ptr.vmem [resolvable:$true] %s38
      %44 = dma.hbm_to_vmem [thread:$0]  %s2, 256, %s39, [#allocation5], 128, 128, 8
    $region13: #{_lambda_.1} parent=1 // pred_fallthru
      _
    // Predicated region
    $region14: #{_lambda_.1} parent=1 // pred_check
      _
    $region15: #{_lambda_.1} parent=1 // pred_check_branch
      %46 = sbr.rel (0) target = $region17
    $region16: #{_lambda_.1} parent=1 // pred_region
      _
    $region17: #{_lambda_.1} parent=1 // pred_fallthru
      _
    // Predicated region
    $region18: #{_lambda_.1} parent=1 // pred_check
      _
    $region19: #{_lambda_.1} parent=1 // pred_check_branch
      %48 = sbr.rel (0) target = $region21
    $region20: #{_lambda_.1} parent=1 // pred_region
      %49 = dma.done [#allocation3], 128
    $region21: #{_lambda_.1} parent=1 // pred_fallthru
      _
    // Predicated region
    $region22: #{_lambda_.1} parent=1 // pred_check
      _
    $region23: #{_lambda_.1} parent=1 // pred_check_branch
      %51 = sbr.rel (0) target = $region25
    $region24: #{_lambda_.1} parent=1 // pred_region
      %52 = dma.done [#allocation5], 512
    $region25: #{_lambda_.1} parent=1 // pred_fallthru
      _
    // Predicated region
    $region26: #{_lambda_.1} parent=1 // pred_check
      _
    $region27: #{_lambda_.1} parent=1 // pred_check_branch
      %54 = sbr.rel (0) target = $region29
    $region28: #{_lambda_.1} parent=1 // pred_region
      %55 = dma.done [#allocation5], 256
    $region29: #{_lambda_.1} parent=1 // pred_fallthru
      _
    %v56 = vld [vmem:[#allocation2] sm:$0xff]
    %v57 = vld [vmem:[#allocation4] sm:$0xff]
    %v58 = vld [vmem:[#allocation4 + $0x8] sm:$0xff]
    %v59 = vld [vmem:[#allocation4 + $0x10] sm:$0xff]
    %v60 = vld [vmem:[#allocation4 + $0x18] sm:$0xff]
    %vm61 = vcmask 261120
    %v63 = vsel %vm61, %v56, 0
    %65 = vmatprep.subr.mxu0 0.0
    %66 = vmatpush1.msra.mxu0 %v57
    %67 = vmatprep.subr.mxu0 0.0
    %68 = vmatpush1.msra.mxu0 %v58
    %69 = vmatprep.subr.mxu0 0.0
    %70 = vmatpush1.msra.mxu0 %v59
    %71 = vmatprep.subr.mxu0 0.0
    %72 = vmatpush1.msra.mxu0 %v60
    %73 = vmatprep.subr.mxu0 0.0
    %74 = vmatpush1.msra.mxu0 0.0
    %75 = vmatprep.subr.mxu0 0.0
    %76 = vmatpush1.msra.mxu0 0.0
    %77 = vmatprep.subr.mxu0 0.0
    %78 = vmatpush1.msra.mxu0 0.0
    %79 = vmatprep.subr.mxu0 0.0
    %80 = vmatpush1.msra.mxu0 0.0
    %81 = vmatprep.subr.mxu0 0.0
    %82 = vmatpush1.msra.mxu0 0.0
    %83 = vmatprep.subr.mxu0 0.0
    %84 = vmatpush1.msra.mxu0 0.0
    %85 = vmatprep.subr.mxu0 0.0
    %86 = vmatpush1.msra.mxu0 0.0
    %87 = vmatprep.subr.mxu0 0.0
    %88 = vmatpush1.msra.mxu0 0.0
    %89 = vmatprep.subr.mxu0 0.0
    %90 = vmatpush1.msra.mxu0 0.0
    %91 = vmatprep.subr.mxu0 0.0
    %92 = vmatpush1.msra.mxu0 0.0
    %93 = vmatprep.subr.mxu0 0.0
    %94 = vmatpush1.msra.mxu0 0.0
    %95 = vmatprep.subr.mxu0 0.0
    %96 = vmatpush1.msra.mxu0 0.0
    %97 = vmatprep.subr.mxu0 0.0
    %98 = vmatpush1.msra.mxu0 0.0
    %99 = vmatprep.subr.mxu0 0.0
    %100 = vmatpush1.msra.mxu0 0.0
    %101 = vmatprep.subr.mxu0 0.0
    %102 = vmatpush1.msra.mxu0 0.0
    %103 = vmatprep.subr.mxu0 0.0
    %104 = vmatpush1.msra.mxu0 0.0
    %105 = vmatprep.subr.mxu0 0.0
    %106 = vmatpush1.msra.mxu0 0.0
    %107 = vmatprep.subr.mxu0 0.0
    %108 = vmatpush1.msra.mxu0 0.0
    %109 = vmatprep.subr.mxu0 0.0
    %110 = vmatpush1.msra.mxu0 0.0
    %111 = vmatprep.subr.mxu0 0.0
    %112 = vmatpush1.msra.mxu0 0.0
    %113 = vmatprep.subr.mxu0 0.0
    %114 = vmatpush1.msra.mxu0 0.0
    %115 = vmatprep.subr.mxu0 0.0
    %116 = vmatpush1.msra.mxu0 0.0
    %117 = vmatprep.subr.mxu0 0.0
    %118 = vmatpush1.msra.mxu0 0.0
    %119 = vmatprep.subr.mxu0 0.0
    %120 = vmatpush1.msra.mxu0 0.0
    %121 = vmatprep.subr.mxu0 0.0
    %122 = vmatpush1.msra.mxu0 0.0
    %123 = vmatprep.subr.mxu0 0.0
    %124 = vmatpush1.msra.mxu0 0.0
    %125 = vmatprep.subr.mxu0 0.0
    %126 = vmatpush1.msra.mxu0 0.0
    %127 = vmatprep.subr.mxu0 0.0
    %128 = vmatpush1.msra.mxu0 0.0
    %129 = vmatprep.mubr.f32.mxu0 0.0
    %130 = vmatmul.mubr.f32.gmra.mrb[0].mxu0 %v63
    %v131 = vpop.f32.mrb[0].mxu0
    %v132 = vadd.f32 0.0, %v131
    %v133 = vpop.f32.mrb[0].mxu0
    %134 = vdwg.mxu0
    %v135 = vld [vmem:[%s3] sm:$0xff]
    %vm136 = vcmask 130048
    %v137 = vsel %vm136, %v132, 0.0
    %v138 = vrot.slane %v137, 4
    %v139 = vadd.f32 %v137, %v138
    %v140 = vrot.slane %v139, 2
    %v141 = vadd.f32 %v139, %v140
    %v142 = vrot.slane %v141, 1
    %v143 = vadd.f32 %v141, %v142
    %v144 = vrcp.pop 8.0
    %v145 = vmul.f32 %v143, %v144
    %v146 = vsub.f32 %v132, %v145
    %v147 = vmul.f32 %v146, %v146
    %v148 = vsel %vm136, %v147, 0.0
    %v149 = vrot.slane %v148, 4
    %v150 = vadd.f32 %v148, %v149
    %v151 = vrot.slane %v150, 2
    %v152 = vadd.f32 %v150, %v151
    %v153 = vrot.slane %v152, 1
    %v154 = vadd.f32 %v152, %v153
    %v155 = vmul.f32 %v154, %v144
    %v156 = vadd.f32 %v155, 1e-05
    %v157 = vrsqrt.pop %v156
    %v158 = vmul.f32 %v135, %v157
    %v159 = vlaneseq
    %v160 = vshrl.u32 %v159, 7
    %v161 = vsub.s32 0, %v160
    %v162 = vrot.slane %v158, %v161
    %v163 = vmul.f32 %v146, %v162
    %v164 = vlaneseq
    %v165 = vshrl.u32 %v164, 7
    %v166 = vsub.s32 1, %v165
    %v167 = vrot.slane %v135, %v166
    %v168 = vadd.f32 %v163, %v167
    %v169 = vmul.f32 %v168, 0.01
    %v170 = vmax.f32 %v168, %v169
    %v171 = vld [vmem:[#allocation6] sm:$0xff]
    %v172 = vld [vmem:[#allocation6 + $0x8] sm:$0xff]
    %v173 = vlaneseq
    %v174 = vshrl.u32 %v173, 7
    %v175 = vsub.s32 2, %v174
    %v176 = vrot.slane %v135, %v175
    %v178 = vsel %vm136, %v170, 0
    %180 = vmatprep.subr.mxu0 0.0
    %181 = vmatpush1.msra.mxu0 %v171
    %182 = vmatprep.subr.mxu0 0.0
    %183 = vmatpush1.msra.mxu0 %v172
    %184 = vmatprep.subr.mxu0 0.0
    %185 = vmatpush1.msra.mxu0 0.0
    %186 = vmatprep.subr.mxu0 0.0
    %187 = vmatpush1.msra.mxu0 0.0
    %188 = vmatprep.subr.mxu0 0.0
    %189 = vmatpush1.msra.mxu0 0.0
    %190 = vmatprep.subr.mxu0 0.0
    %191 = vmatpush1.msra.mxu0 0.0
    %192 = vmatprep.subr.mxu0 0.0
    %193 = vmatpush1.msra.mxu0 0.0
    %194 = vmatprep.subr.mxu0 0.0
    %195 = vmatpush1.msra.mxu0 0.0
    %196 = vmatprep.subr.mxu0 0.0
    %197 = vmatpush1.msra.mxu0 0.0
    %198 = vmatprep.subr.mxu0 0.0
    %199 = vmatpush1.msra.mxu0 0.0
    %200 = vmatprep.subr.mxu0 0.0
    %201 = vmatpush1.msra.mxu0 0.0
    %202 = vmatprep.subr.mxu0 0.0
    %203 = vmatpush1.msra.mxu0 0.0
    %204 = vmatprep.subr.mxu0 0.0
    %205 = vmatpush1.msra.mxu0 0.0
    %206 = vmatprep.subr.mxu0 0.0
    %207 = vmatpush1.msra.mxu0 0.0
    %208 = vmatprep.subr.mxu0 0.0
    %209 = vmatpush1.msra.mxu0 0.0
    %210 = vmatprep.subr.mxu0 0.0
    %211 = vmatpush1.msra.mxu0 0.0
    %212 = vmatprep.subr.mxu0 0.0
    %213 = vmatpush1.msra.mxu0 0.0
    %214 = vmatprep.subr.mxu0 0.0
    %215 = vmatpush1.msra.mxu0 0.0
    %216 = vmatprep.subr.mxu0 0.0
    %217 = vmatpush1.msra.mxu0 0.0
    %218 = vmatprep.subr.mxu0 0.0
    %219 = vmatpush1.msra.mxu0 0.0
    %220 = vmatprep.subr.mxu0 0.0
    %221 = vmatpush1.msra.mxu0 0.0
    %222 = vmatprep.subr.mxu0 0.0
    %223 = vmatpush1.msra.mxu0 0.0
    %224 = vmatprep.subr.mxu0 0.0
    %225 = vmatpush1.msra.mxu0 0.0
    %226 = vmatprep.subr.mxu0 0.0
    %227 = vmatpush1.msra.mxu0 0.0
    %228 = vmatprep.subr.mxu0 0.0
    %229 = vmatpush1.msra.mxu0 0.0
    %230 = vmatprep.subr.mxu0 0.0
    %231 = vmatpush1.msra.mxu0 0.0
    %232 = vmatprep.subr.mxu0 0.0
    %233 = vmatpush1.msra.mxu0 0.0
    %234 = vmatprep.subr.mxu0 0.0
    %235 = vmatpush1.msra.mxu0 0.0
    %236 = vmatprep.subr.mxu0 0.0
    %237 = vmatpush1.msra.mxu0 0.0
    %238 = vmatprep.subr.mxu0 0.0
    %239 = vmatpush1.msra.mxu0 0.0
    %240 = vmatprep.subr.mxu0 0.0
    %241 = vmatpush1.msra.mxu0 0.0
    %242 = vmatprep.subr.mxu0 0.0
    %243 = vmatpush1.msra.mxu0 0.0
    %244 = vmatprep.mubr.f32.mxu0 0.0
    %245 = vmatmul.mubr.f32.gmra.mrb[0].mxu0 %v178
    %v246 = vpop.f32.mrb[0].mxu0
    %v247 = vadd.f32 %v176, %v246
    %v248 = vpop.f32.mrb[0].mxu0
    %249 = vdwg.mxu0
    %250 = vmax.xlane.f32.xlu0 %v247
    %v251 = vpop.xlane.xlu0 %250
    %v252 = vsub.f32 %v247, %v251
    %v253 = vmul.f32 %v252, 1.442695
    %v254 = vpow.pop %v253
    %255 = vadd.xlane.f32.xlu0 %v254
    %v256 = vpop.xlane.xlu0 %255
    %v257 = vlog2.pop %v256
    %v258 = vmul.f32 %v257, 0.6931472
    %v259 = vsub.f32 %v252, %v258
    %260 = vst [vmem:[%s4] sm:$0xff] %v259
    // Predicated region
    $region30: #{_lambda_.1} parent=1 // pred_check
      _
    $region31: #{_lambda_.1} parent=1 // pred_check_branch
      %262 = sbr.rel (0) target = $region33
    $region32: #{_lambda_.1} parent=1 // pred_region
      _
    $region33: #{_lambda_.1} parent=1 // pred_fallthru
      _
    // Predicated region
    $region34: #{_lambda_.1} parent=1 // pred_check
      _
    $region35: #{_lambda_.1} parent=1 // pred_check_branch
      %264 = sbr.rel (0) target = $region37
    $region36: #{_lambda_.1} parent=1 // pred_region
      _
    $region37: #{_lambda_.1} parent=1 // pred_fallthru
      _
    %265 = vsyncpa [#allocation3], 1
    %266 = vsyncpa [#allocation5], 1

</llo_original>
